<compile_context>
chip_gen: v7x
topology: tpu7x:2x2x1
jax: 0.10.0
libtpu: 0.0.40
codegen_flags: <defaults>
</compile_context>

<pallas_src>
import jax
import jax.numpy as jnp
from jax import lax
from jax.experimental import pallas as pl
from jax.experimental.pallas import tpu as pltpu


def lstm_kernel(x_ref, wih_ref, whh_ref, b_ref, wlin_ref, blin_ref, out_ref):
    """Whole-sequence LSTM + final Linear in one kernel invocation.

    x_ref    : (B, T, I)   batch-major input (same layout as the PyTorch module)
    wih_ref  : (I, 4H)     W_ih^T, PyTorch gate order (i, f, g, o) along the 4H axis
    whh_ref  : (4H, 4H)    W_hh^T zero-padded: rows [0, H) hold W_hh^T, rows [H, 4H) are 0
    b_ref    : (1, 4H)     b_ih + b_hh
    wlin_ref : (4H, 4)     W_linear^T zero-padded the same way
    blin_ref : (1, 4)      linear bias
    out_ref  : (B, 4)      output at the last timestep
    """
    B, T, I = x_ref.shape
    G = wih_ref.shape[1]          # 4*H  (== 128 lanes for H == 32 -> exactly one vreg / MXU pass)
    H = G // 4

    # ---- Hoisted input projection: one MXU call for all timesteps, bias folded in. ----
    x_flat = x_ref[...].reshape(B * T, I)                       # layout-free leading-dim collapse
    xw = (
        jnp.dot(x_flat, wih_ref[...], preferred_element_type=jnp.float32)
        + b_ref[...]
    ).reshape(B, T, G)                                          # (B, T, 4H)

    whh = whh_ref[...]            # load once; stays resident across the unrolled recurrence

    # Lane mask selecting the tanh-activated 'g' gate (lanes [2H, 3H)); hoisted (built once).
    lane = lax.broadcasted_iota(jnp.int32, (B, G), 1)
    g_mask = (lane >= 2 * H) & (lane < 3 * H)

    # State carried 4H lanes wide; only lanes [0, H) are meaningful.  The junk lanes stay
    # bounded (products of activations) and hit the zero rows of whh / wlin -> contribute 0.
    h_w = jnp.zeros((B, G), jnp.float32)
    c_w = jnp.zeros((B, G), jnp.float32)

    # ---- Fully (statically) unrolled recurrence: one (B,4H)x(4H,4H) MXU matmul per step. ----
    for t in range(T):                                          # T is a static Python int
        gates = xw[:, t, :] + jnp.dot(h_w, whh, preferred_element_type=jnp.float32)  # (B, 4H)
        # Full-tile activations on the EUP, no 32-lane slices.
        act = jnp.where(g_mask, jnp.tanh(gates), jax.nn.sigmoid(gates))
        i_al = act                                    # i gate already at lanes [0, H)
        f_al = pltpu.roll(act, shift=G - H, axis=1)   # f gate -> lanes [0, H)  (XLU, free slot)
        g_al = pltpu.roll(act, shift=G - 2 * H, axis=1)
        o_al = pltpu.roll(act, shift=G - 3 * H, axis=1)
        c_w = f_al * c_w + i_al * g_al
        h_w = o_al * jnp.tanh(c_w)

    # ---- Final Linear; zero-padded weight rows cancel the junk lanes of h_w exactly. ----
    out_ref[...] = (
        jnp.dot(h_w, wlin_ref[...], preferred_element_type=jnp.float32) + blin_ref[...]
    )


def lstm_model_forward(x, params):
    """Equivalent of LSTM_Model.forward: x (B, T, 4) -> (B, 1, 4)."""
    B = x.shape[0]
    out = pl.pallas_call(
        lstm_kernel,
        out_shape=jax.ShapeDtypeStruct((B, 4), jnp.float32),
        # Everything is tiny (<100 KiB total) -> single invocation, all operands resident in VMEM.
        # For large batch: block B (multiple of 8, ideally >=128) over a grid axis marked
        # "parallel" so v7x's two TensorCores split the batch; for large T, keep x in HBM
        # (memory_space=pl.ANY) and double-buffer T-chunks.
        in_specs=[pl.BlockSpec(memory_space=pltpu.MemorySpace.VMEM)] * 6,
        out_specs=pl.BlockSpec(memory_space=pltpu.MemorySpace.VMEM),
    )(
        x,
        params["w_ih_t"],
        params["w_hh_pad"],
        params["b"],
        params["w_lin_pad"],
        params["b_lin"],
    )
    return out[:, None, :]


def init_params(key, input_size=4, hidden_size=32):
    """Deterministic parameter init (uniform, like PyTorch's default scale 1/sqrt(H))."""
    H, I = hidden_size, input_size
    G = 4 * H
    k = 1.0 / jnp.sqrt(jnp.float32(H))
    keys = jax.random.split(key, 6)
    w_ih = jax.random.uniform(keys[0], (G, I), jnp.float32, -k, k)   # PyTorch layout (4H, I)
    w_hh = jax.random.uniform(keys[1], (G, H), jnp.float32, -k, k)   # (4H, H)
    b_ih = jax.random.uniform(keys[2], (G,), jnp.float32, -k, k)
    b_hh = jax.random.uniform(keys[3], (G,), jnp.float32, -k, k)
    w_lin = jax.random.uniform(keys[4], (4, H), jnp.float32, -k, k)
    b_lin = jax.random.uniform(keys[5], (4,), jnp.float32, -k, k)
    # Kernel-side padded weights: rows [H:4H) are zero so the 4H-wide carried state needs no slicing.
    w_hh_pad = jnp.zeros((G, G), jnp.float32).at[:H, :].set(w_hh.T)
    w_lin_pad = jnp.zeros((G, 4), jnp.float32).at[:H, :].set(w_lin.T)
    return {
        "hidden_size": H,
        "w_ih_t": w_ih.T,                 # (I, 4H)
        "w_hh_pad": w_hh_pad,             # (4H, 4H)
        "b": (b_ih + b_hh)[None, :],      # (1, 4H)
        "w_lin_pad": w_lin_pad,           # (4H, 4)
        "b_lin": b_lin[None, :],          # (1, 4)
    }


def reference_forward(x, params):
    """Pure-JAX reference of the same math (correctness check)."""
    B, T, I = x.shape
    H = params["hidden_size"]
    w_ih_t = params["w_ih_t"]
    w_hh_t = params["w_hh_pad"][:H, :]
    w_lin_t = params["w_lin_pad"][:H, :]
    h = jnp.zeros((B, H), jnp.float32)
    c = jnp.zeros((B, H), jnp.float32)
    for t in range(T):
        gates = x[:, t, :] @ w_ih_t + h @ w_hh_t + params["b"]
        i_g = jax.nn.sigmoid(gates[:, 0 * H:1 * H])
        f_g = jax.nn.sigmoid(gates[:, 1 * H:2 * H])
        g_g = jnp.tanh(gates[:, 2 * H:3 * H])
        o_g = jax.nn.sigmoid(gates[:, 3 * H:4 * H])
        c = f_g * c + i_g * g_g
        h = o_g * jnp.tanh(c)
    out = h @ w_lin_t + params["b_lin"]
    return out[:, None, :]


if __name__ == "__main__":
    key = jax.random.PRNGKey(0)
    k_param, k_x = jax.random.split(key)

    B, T, I, H = 2, 8, 4, 32
    params = init_params(k_param, input_size=I, hidden_size=H)
    x = jax.random.normal(k_x, (B, T, I), jnp.float32)

    out = lstm_model_forward(x, params)
    out = jax.block_until_ready(out)

    ref = reference_forward(x, params)
    assert out.shape == (B, 1, 4), out.shape
    assert jnp.allclose(out, ref, atol=1e-4, rtol=1e-4), (out, ref)

    print("KERNEL_OK")
</pallas_src>

<mosaic_0001>
module attributes {stable_mosaic.version = 11 : i64} {
  func.func @lstm_kernel(%arg0: memref<2x8x4xf32, #tpu.memory_space<vmem>>, %arg1: memref<4x128xf32, #tpu.memory_space<vmem>>, %arg2: memref<128x128xf32, #tpu.memory_space<vmem>>, %arg3: memref<1x128xf32, #tpu.memory_space<vmem>>, %arg4: memref<128x4xf32, #tpu.memory_space<vmem>>, %arg5: memref<1x4xf32, #tpu.memory_space<vmem>>, %arg6: memref<2x4xf32, #tpu.memory_space<vmem>>) attributes {dimension_semantics = [], scalar_prefetch = 0 : i64, scratch_operands = 0 : i64, tpu.core_type = #tpu.core_type<tc>} {
    %c0 = arith.constant 0 : index
    %c0_0 = arith.constant 0 : index
    %c0_1 = arith.constant 0 : index
    %0 = vector.load %arg0[%c0, %c0_0, %c0_1] : memref<2x8x4xf32, #tpu.memory_space<vmem>>, vector<2x8x4xf32>
    %1 = vector.shape_cast %0 : vector<2x8x4xf32> to vector<16x4xf32>
    %c0_2 = arith.constant 0 : index
    %c0_3 = arith.constant 0 : index
    %2 = vector.load %arg1[%c0_2, %c0_3] : memref<4x128xf32, #tpu.memory_space<vmem>>, vector<4x128xf32>
    %cst = arith.constant dense<0.000000e+00> : vector<16x128xf32>
    %3 = tpu.matmul %1, %2, %cst {dimension_numbers = #tpu.dot_dimension_numbers<[1], [0], [0], [1], [0, 0, 1, 1], [], []>} : vector<16x4xf32>, vector<4x128xf32>, vector<16x128xf32> -> vector<16x128xf32>
    %c0_4 = arith.constant 0 : index
    %c0_5 = arith.constant 0 : index
    %4 = vector.load %arg3[%c0_4, %c0_5] : memref<1x128xf32, #tpu.memory_space<vmem>>, vector<1x128xf32>
    %5 = vector.broadcast %4 : vector<1x128xf32> to vector<16x128xf32>
    %6 = arith.addf %3, %5 : vector<16x128xf32>
    %7 = vector.shape_cast %6 : vector<16x128xf32> to vector<2x8x128xf32>
    %c0_6 = arith.constant 0 : index
    %c0_7 = arith.constant 0 : index
    %8 = vector.load %arg2[%c0_6, %c0_7] : memref<128x128xf32, #tpu.memory_space<vmem>>, vector<128x128xf32>
    %9 = tpu.iota {dimensions = array<i32: 1>} : vector<2x128xi32>
    %c64_i32 = arith.constant 64 : i32
    %10 = vector.broadcast %c64_i32 : i32 to vector<2x128xi32>
    %11 = arith.cmpi sge, %9, %10 : vector<2x128xi32>
    %c96_i32 = arith.constant 96 : i32
    %12 = vector.broadcast %c96_i32 : i32 to vector<2x128xi32>
    %13 = arith.cmpi slt, %9, %12 : vector<2x128xi32>
    %14 = arith.andi %11, %13 : vector<2x128xi1>
    %cst_8 = arith.constant 0.000000e+00 : f32
    %15 = vector.broadcast %cst_8 : f32 to vector<2x128xf32>
    %cst_9 = arith.constant 0.000000e+00 : f32
    %16 = vector.broadcast %cst_9 : f32 to vector<2x128xf32>
    %17 = vector.extract_strided_slice %7 {offsets = [0, 0, 0], sizes = [2, 1, 128], strides = [1, 1, 1]} : vector<2x8x128xf32> to vector<2x1x128xf32>
    %18 = vector.shape_cast %17 : vector<2x1x128xf32> to vector<2x128xf32>
    %cst_10 = arith.constant dense<0.000000e+00> : vector<2x128xf32>
    %19 = tpu.matmul %15, %8, %cst_10 {dimension_numbers = #tpu.dot_dimension_numbers<[1], [0], [0], [1], [0, 0, 1, 1], [], []>} : vector<2x128xf32>, vector<128x128xf32>, vector<2x128xf32> -> vector<2x128xf32>
    %20 = arith.addf %18, %19 : vector<2x128xf32>
    %21 = math.tanh %20 : vector<2x128xf32>
    %22 = arith.negf %20 : vector<2x128xf32>
    %23 = math.exp %22 : vector<2x128xf32>
    %cst_11 = arith.constant 1.000000e+00 : f32
    %24 = vector.broadcast %cst_11 : f32 to vector<2x128xf32>
    %25 = arith.addf %24, %23 : vector<2x128xf32>
    %26 = arith.divf %24, %25 : vector<2x128xf32>
    %27 = arith.select %14, %21, %26 : vector<2x128xi1>, vector<2x128xf32>
    %c96_i32_12 = arith.constant 96 : i32
    %28 = tpu.dynamic_rotate %27 by %c96_i32_12 dim 1 : vector<2x128xf32>, i32 -> vector<2x128xf32>
    %c64_i32_13 = arith.constant 64 : i32
    %29 = tpu.dynamic_rotate %27 by %c64_i32_13 dim 1 : vector<2x128xf32>, i32 -> vector<2x128xf32>
    %c32_i32 = arith.constant 32 : i32
    %30 = tpu.dynamic_rotate %27 by %c32_i32 dim 1 : vector<2x128xf32>, i32 -> vector<2x128xf32>
    %31 = arith.mulf %28, %16 : vector<2x128xf32>
    %32 = arith.mulf %27, %29 : vector<2x128xf32>
    %33 = arith.addf %31, %32 : vector<2x128xf32>
    %34 = math.tanh %33 : vector<2x128xf32>
    %35 = arith.mulf %30, %34 : vector<2x128xf32>
    %36 = vector.extract_strided_slice %7 {offsets = [0, 1, 0], sizes = [2, 1, 128], strides = [1, 1, 1]} : vector<2x8x128xf32> to vector<2x1x128xf32>
    %37 = vector.shape_cast %36 : vector<2x1x128xf32> to vector<2x128xf32>
    %cst_14 = arith.constant dense<0.000000e+00> : vector<2x128xf32>
    %38 = tpu.matmul %35, %8, %cst_14 {dimension_numbers = #tpu.dot_dimension_numbers<[1], [0], [0], [1], [0, 0, 1, 1], [], []>} : vector<2x128xf32>, vector<128x128xf32>, vector<2x128xf32> -> vector<2x128xf32>
    %39 = arith.addf %37, %38 : vector<2x128xf32>
    %40 = math.tanh %39 : vector<2x128xf32>
    %41 = arith.negf %39 : vector<2x128xf32>
    %42 = math.exp %41 : vector<2x128xf32>
    %cst_15 = arith.constant 1.000000e+00 : f32
    %43 = vector.broadcast %cst_15 : f32 to vector<2x128xf32>
    %44 = arith.addf %43, %42 : vector<2x128xf32>
    %45 = arith.divf %43, %44 : vector<2x128xf32>
    %46 = arith.select %14, %40, %45 : vector<2x128xi1>, vector<2x128xf32>
    %c96_i32_16 = arith.constant 96 : i32
    %47 = tpu.dynamic_rotate %46 by %c96_i32_16 dim 1 : vector<2x128xf32>, i32 -> vector<2x128xf32>
    %c64_i32_17 = arith.constant 64 : i32
    %48 = tpu.dynamic_rotate %46 by %c64_i32_17 dim 1 : vector<2x128xf32>, i32 -> vector<2x128xf32>
    %c32_i32_18 = arith.constant 32 : i32
    %49 = tpu.dynamic_rotate %46 by %c32_i32_18 dim 1 : vector<2x128xf32>, i32 -> vector<2x128xf32>
    %50 = arith.mulf %47, %33 : vector<2x128xf32>
    %51 = arith.mulf %46, %48 : vector<2x128xf32>
    %52 = arith.addf %50, %51 : vector<2x128xf32>
    %53 = math.tanh %52 : vector<2x128xf32>
    %54 = arith.mulf %49, %53 : vector<2x128xf32>
    %55 = vector.extract_strided_slice %7 {offsets = [0, 2, 0], sizes = [2, 1, 128], strides = [1, 1, 1]} : vector<2x8x128xf32> to vector<2x1x128xf32>
    %56 = vector.shape_cast %55 : vector<2x1x128xf32> to vector<2x128xf32>
    %cst_19 = arith.constant dense<0.000000e+00> : vector<2x128xf32>
    %57 = tpu.matmul %54, %8, %cst_19 {dimension_numbers = #tpu.dot_dimension_numbers<[1], [0], [0], [1], [0, 0, 1, 1], [], []>} : vector<2x128xf32>, vector<128x128xf32>, vector<2x128xf32> -> vector<2x128xf32>
    %58 = arith.addf %56, %57 : vector<2x128xf32>
    %59 = math.tanh %58 : vector<2x128xf32>
    %60 = arith.negf %58 : vector<2x128xf32>
    %61 = math.exp %60 : vector<2x128xf32>
    %cst_20 = arith.constant 1.000000e+00 : f32
    %62 = vector.broadcast %cst_20 : f32 to vector<2x128xf32>
    %63 = arith.addf %62, %61 : vector<2x128xf32>
    %64 = arith.divf %62, %63 : vector<2x128xf32>
    %65 = arith.select %14, %59, %64 : vector<2x128xi1>, vector<2x128xf32>
    %c96_i32_21 = arith.constant 96 : i32
    %66 = tpu.dynamic_rotate %65 by %c96_i32_21 dim 1 : vector<2x128xf32>, i32 -> vector<2x128xf32>
    %c64_i32_22 = arith.constant 64 : i32
    %67 = tpu.dynamic_rotate %65 by %c64_i32_22 dim 1 : vector<2x128xf32>, i32 -> vector<2x128xf32>
    %c32_i32_23 = arith.constant 32 : i32
    %68 = tpu.dynamic_rotate %65 by %c32_i32_23 dim 1 : vector<2x128xf32>, i32 -> vector<2x128xf32>
    %69 = arith.mulf %66, %52 : vector<2x128xf32>
    %70 = arith.mulf %65, %67 : vector<2x128xf32>
    %71 = arith.addf %69, %70 : vector<2x128xf32>
    %72 = math.tanh %71 : vector<2x128xf32>
    %73 = arith.mulf %68, %72 : vector<2x128xf32>
    %74 = vector.extract_strided_slice %7 {offsets = [0, 3, 0], sizes = [2, 1, 128], strides = [1, 1, 1]} : vector<2x8x128xf32> to vector<2x1x128xf32>
    %75 = vector.shape_cast %74 : vector<2x1x128xf32> to vector<2x128xf32>
    %cst_24 = arith.constant dense<0.000000e+00> : vector<2x128xf32>
    %76 = tpu.matmul %73, %8, %cst_24 {dimension_numbers = #tpu.dot_dimension_numbers<[1], [0], [0], [1], [0, 0, 1, 1], [], []>} : vector<2x128xf32>, vector<128x128xf32>, vector<2x128xf32> -> vector<2x128xf32>
    %77 = arith.addf %75, %76 : vector<2x128xf32>
    %78 = math.tanh %77 : vector<2x128xf32>
    %79 = arith.negf %77 : vector<2x128xf32>
    %80 = math.exp %79 : vector<2x128xf32>
    %cst_25 = arith.constant 1.000000e+00 : f32
    %81 = vector.broadcast %cst_25 : f32 to vector<2x128xf32>
    %82 = arith.addf %81, %80 : vector<2x128xf32>
    %83 = arith.divf %81, %82 : vector<2x128xf32>
    %84 = arith.select %14, %78, %83 : vector<2x128xi1>, vector<2x128xf32>
    %c96_i32_26 = arith.constant 96 : i32
    %85 = tpu.dynamic_rotate %84 by %c96_i32_26 dim 1 : vector<2x128xf32>, i32 -> vector<2x128xf32>
    %c64_i32_27 = arith.constant 64 : i32
    %86 = tpu.dynamic_rotate %84 by %c64_i32_27 dim 1 : vector<2x128xf32>, i32 -> vector<2x128xf32>
    %c32_i32_28 = arith.constant 32 : i32
    %87 = tpu.dynamic_rotate %84 by %c32_i32_28 dim 1 : vector<2x128xf32>, i32 -> vector<2x128xf32>
    %88 = arith.mulf %85, %71 : vector<2x128xf32>
    %89 = arith.mulf %84, %86 : vector<2x128xf32>
    %90 = arith.addf %88, %89 : vector<2x128xf32>
    %91 = math.tanh %90 : vector<2x128xf32>
    %92 = arith.mulf %87, %91 : vector<2x128xf32>
    %93 = vector.extract_strided_slice %7 {offsets = [0, 4, 0], sizes = [2, 1, 128], strides = [1, 1, 1]} : vector<2x8x128xf32> to vector<2x1x128xf32>
    %94 = vector.shape_cast %93 : vector<2x1x128xf32> to vector<2x128xf32>
    %cst_29 = arith.constant dense<0.000000e+00> : vector<2x128xf32>
    %95 = tpu.matmul %92, %8, %cst_29 {dimension_numbers = #tpu.dot_dimension_numbers<[1], [0], [0], [1], [0, 0, 1, 1], [], []>} : vector<2x128xf32>, vector<128x128xf32>, vector<2x128xf32> -> vector<2x128xf32>
    %96 = arith.addf %94, %95 : vector<2x128xf32>
    %97 = math.tanh %96 : vector<2x128xf32>
    %98 = arith.negf %96 : vector<2x128xf32>
    %99 = math.exp %98 : vector<2x128xf32>
    %cst_30 = arith.constant 1.000000e+00 : f32
    %100 = vector.broadcast %cst_30 : f32 to vector<2x128xf32>
    %101 = arith.addf %100, %99 : vector<2x128xf32>
    %102 = arith.divf %100, %101 : vector<2x128xf32>
    %103 = arith.select %14, %97, %102 : vector<2x128xi1>, vector<2x128xf32>
    %c96_i32_31 = arith.constant 96 : i32
    %104 = tpu.dynamic_rotate %103 by %c96_i32_31 dim 1 : vector<2x128xf32>, i32 -> vector<2x128xf32>
    %c64_i32_32 = arith.constant 64 : i32
    %105 = tpu.dynamic_rotate %103 by %c64_i32_32 dim 1 : vector<2x128xf32>, i32 -> vector<2x128xf32>
    %c32_i32_33 = arith.constant 32 : i32
    %106 = tpu.dynamic_rotate %103 by %c32_i32_33 dim 1 : vector<2x128xf32>, i32 -> vector<2x128xf32>
    %107 = arith.mulf %104, %90 : vector<2x128xf32>
    %108 = arith.mulf %103, %105 : vector<2x128xf32>
    %109 = arith.addf %107, %108 : vector<2x128xf32>
    %110 = math.tanh %109 : vector<2x128xf32>
    %111 = arith.mulf %106, %110 : vector<2x128xf32>
    %112 = vector.extract_strided_slice %7 {offsets = [0, 5, 0], sizes = [2, 1, 128], strides = [1, 1, 1]} : vector<2x8x128xf32> to vector<2x1x128xf32>
    %113 = vector.shape_cast %112 : vector<2x1x128xf32> to vector<2x128xf32>
    %cst_34 = arith.constant dense<0.000000e+00> : vector<2x128xf32>
    %114 = tpu.matmul %111, %8, %cst_34 {dimension_numbers = #tpu.dot_dimension_numbers<[1], [0], [0], [1], [0, 0, 1, 1], [], []>} : vector<2x128xf32>, vector<128x128xf32>, vector<2x128xf32> -> vector<2x128xf32>
    %115 = arith.addf %113, %114 : vector<2x128xf32>
    %116 = math.tanh %115 : vector<2x128xf32>
    %117 = arith.negf %115 : vector<2x128xf32>
    %118 = math.exp %117 : vector<2x128xf32>
    %cst_35 = arith.constant 1.000000e+00 : f32
    %119 = vector.broadcast %cst_35 : f32 to vector<2x128xf32>
    %120 = arith.addf %119, %118 : vector<2x128xf32>
    %121 = arith.divf %119, %120 : vector<2x128xf32>
    %122 = arith.select %14, %116, %121 : vector<2x128xi1>, vector<2x128xf32>
    %c96_i32_36 = arith.constant 96 : i32
    %123 = tpu.dynamic_rotate %122 by %c96_i32_36 dim 1 : vector<2x128xf32>, i32 -> vector<2x128xf32>
    %c64_i32_37 = arith.constant 64 : i32
    %124 = tpu.dynamic_rotate %122 by %c64_i32_37 dim 1 : vector<2x128xf32>, i32 -> vector<2x128xf32>
    %c32_i32_38 = arith.constant 32 : i32
    %125 = tpu.dynamic_rotate %122 by %c32_i32_38 dim 1 : vector<2x128xf32>, i32 -> vector<2x128xf32>
    %126 = arith.mulf %123, %109 : vector<2x128xf32>
    %127 = arith.mulf %122, %124 : vector<2x128xf32>
    %128 = arith.addf %126, %127 : vector<2x128xf32>
    %129 = math.tanh %128 : vector<2x128xf32>
    %130 = arith.mulf %125, %129 : vector<2x128xf32>
    %131 = vector.extract_strided_slice %7 {offsets = [0, 6, 0], sizes = [2, 1, 128], strides = [1, 1, 1]} : vector<2x8x128xf32> to vector<2x1x128xf32>
    %132 = vector.shape_cast %131 : vector<2x1x128xf32> to vector<2x128xf32>
    %cst_39 = arith.constant dense<0.000000e+00> : vector<2x128xf32>
    %133 = tpu.matmul %130, %8, %cst_39 {dimension_numbers = #tpu.dot_dimension_numbers<[1], [0], [0], [1], [0, 0, 1, 1], [], []>} : vector<2x128xf32>, vector<128x128xf32>, vector<2x128xf32> -> vector<2x128xf32>
    %134 = arith.addf %132, %133 : vector<2x128xf32>
    %135 = math.tanh %134 : vector<2x128xf32>
    %136 = arith.negf %134 : vector<2x128xf32>
    %137 = math.exp %136 : vector<2x128xf32>
    %cst_40 = arith.constant 1.000000e+00 : f32
    %138 = vector.broadcast %cst_40 : f32 to vector<2x128xf32>
    %139 = arith.addf %138, %137 : vector<2x128xf32>
    %140 = arith.divf %138, %139 : vector<2x128xf32>
    %141 = arith.select %14, %135, %140 : vector<2x128xi1>, vector<2x128xf32>
    %c96_i32_41 = arith.constant 96 : i32
    %142 = tpu.dynamic_rotate %141 by %c96_i32_41 dim 1 : vector<2x128xf32>, i32 -> vector<2x128xf32>
    %c64_i32_42 = arith.constant 64 : i32
    %143 = tpu.dynamic_rotate %141 by %c64_i32_42 dim 1 : vector<2x128xf32>, i32 -> vector<2x128xf32>
    %c32_i32_43 = arith.constant 32 : i32
    %144 = tpu.dynamic_rotate %141 by %c32_i32_43 dim 1 : vector<2x128xf32>, i32 -> vector<2x128xf32>
    %145 = arith.mulf %142, %128 : vector<2x128xf32>
    %146 = arith.mulf %141, %143 : vector<2x128xf32>
    %147 = arith.addf %145, %146 : vector<2x128xf32>
    %148 = math.tanh %147 : vector<2x128xf32>
    %149 = arith.mulf %144, %148 : vector<2x128xf32>
    %150 = vector.extract_strided_slice %7 {offsets = [0, 7, 0], sizes = [2, 1, 128], strides = [1, 1, 1]} : vector<2x8x128xf32> to vector<2x1x128xf32>
    %151 = vector.shape_cast %150 : vector<2x1x128xf32> to vector<2x128xf32>
    %cst_44 = arith.constant dense<0.000000e+00> : vector<2x128xf32>
    %152 = tpu.matmul %149, %8, %cst_44 {dimension_numbers = #tpu.dot_dimension_numbers<[1], [0], [0], [1], [0, 0, 1, 1], [], []>} : vector<2x128xf32>, vector<128x128xf32>, vector<2x128xf32> -> vector<2x128xf32>
    %153 = arith.addf %151, %152 : vector<2x128xf32>
    %154 = math.tanh %153 : vector<2x128xf32>
    %155 = arith.negf %153 : vector<2x128xf32>
    %156 = math.exp %155 : vector<2x128xf32>
    %cst_45 = arith.constant 1.000000e+00 : f32
    %157 = vector.broadcast %cst_45 : f32 to vector<2x128xf32>
    %158 = arith.addf %157, %156 : vector<2x128xf32>
    %159 = arith.divf %157, %158 : vector<2x128xf32>
    %160 = arith.select %14, %154, %159 : vector<2x128xi1>, vector<2x128xf32>
    %c96_i32_46 = arith.constant 96 : i32
    %161 = tpu.dynamic_rotate %160 by %c96_i32_46 dim 1 : vector<2x128xf32>, i32 -> vector<2x128xf32>
    %c64_i32_47 = arith.constant 64 : i32
    %162 = tpu.dynamic_rotate %160 by %c64_i32_47 dim 1 : vector<2x128xf32>, i32 -> vector<2x128xf32>
    %c32_i32_48 = arith.constant 32 : i32
    %163 = tpu.dynamic_rotate %160 by %c32_i32_48 dim 1 : vector<2x128xf32>, i32 -> vector<2x128xf32>
    %164 = arith.mulf %161, %147 : vector<2x128xf32>
    %165 = arith.mulf %160, %162 : vector<2x128xf32>
    %166 = arith.addf %164, %165 : vector<2x128xf32>
    %167 = math.tanh %166 : vector<2x128xf32>
    %168 = arith.mulf %163, %167 : vector<2x128xf32>
    %c0_49 = arith.constant 0 : index
    %c0_50 = arith.constant 0 : index
    %169 = vector.load %arg4[%c0_49, %c0_50] : memref<128x4xf32, #tpu.memory_space<vmem>>, vector<128x4xf32>
    %cst_51 = arith.constant dense<0.000000e+00> : vector<2x4xf32>
    %170 = tpu.matmul %168, %169, %cst_51 {dimension_numbers = #tpu.dot_dimension_numbers<[1], [0], [0], [1], [0, 0, 1, 1], [], []>} : vector<2x128xf32>, vector<128x4xf32>, vector<2x4xf32> -> vector<2x4xf32>
    %c0_52 = arith.constant 0 : index
    %c0_53 = arith.constant 0 : index
    %171 = vector.load %arg5[%c0_52, %c0_53] : memref<1x4xf32, #tpu.memory_space<vmem>>, vector<1x4xf32>
    %172 = vector.broadcast %171 : vector<1x4xf32> to vector<2x4xf32>
    %173 = arith.addf %170, %172 : vector<2x4xf32>
    %c0_54 = arith.constant 0 : index
    %c0_55 = arith.constant 0 : index
    %174 = vector.load %arg6[%c0_54, %c0_55] : memref<2x4xf32, #tpu.memory_space<vmem>>, vector<2x4xf32>
    tpu.vector_store %arg6[%c0_54, %c0_55], %173 {strides = array<i32>} : memref<2x4xf32, #tpu.memory_space<vmem>>, vector<2x4xf32>,
    return
  }
}

</mosaic_0001>

<llo_original>
// kernel: tpu_custom_call.1
$region0: #{tpu_custom_call.1}
  #allocation0 [shape = 'u32[]', space=smem, size = 0x4, offset = 0x4, fixed_abs, tag = 'smem constant byte address 0x4 - core index']
  #allocation1 [shape = 'u32[144,128]{1,0:T(1,128)}', space=vmem, size = 0x12000, scoped, tag = 'internal scratch']
  %s0 = inlined_call_operand.vmem [shape: f32[2,8,4], index: 0, kind: input, shape index: {}]
  %s1 = inlined_call_operand.vmem [shape: f32[4,128], index: 1, kind: input, shape index: {}]
  %s2 = inlined_call_operand.vmem [shape: f32[128,128], index: 2, kind: input, shape index: {}]
  %s3 = inlined_call_operand.vmem [shape: f32[1,128], index: 3, kind: input, shape index: {}]
  %s4 = inlined_call_operand.vmem [shape: f32[128,4], index: 4, kind: input, shape index: {}]
  %s5 = inlined_call_operand.vmem [shape: f32[1,4], index: 5, kind: input, shape index: {}]
  %s6 = inlined_call_operand.hbm [shape: f32[2,4], index: 6, kind: output, shape index: {}]
  %s7 = sld [smem:[#allocation0]]
  $region34: #{tpu_custom_call.1} parent=0
    _
  %s9 = ssub.s32 1, %s7
  %s10 = scalar_select 0, %s9, %s7
  $region1: #{tpu_custom_call.1} parent=0
    #allocation2 [shape = 'u8[1024]{0}', space=vmem, size = 0x400, scoped, tag = 'output window, operand 0, single buffered']
    #allocation3 [shape = 's32[1]{0}', space=sflag, size = 0x4, scoped, tag = 'scoped memory for tpu_custom_call.1']
    %11 = vsyncpa [#allocation3], 0
    // Predicated region
    $region2: #{tpu_custom_call.1} parent=1 // pred_check
      _
    $region3: #{tpu_custom_call.1} parent=1 // pred_check_branch
      %13 = sbr.rel (0) target = $region5
    $region4: #{tpu_custom_call.1} parent=1 // pred_region
      _
    $region5: #{tpu_custom_call.1} parent=1 // pred_fallthru
      _
    // Predicated region
    $region6: #{tpu_custom_call.1} parent=1 // pred_check
      _
    $region7: #{tpu_custom_call.1} parent=1 // pred_check_branch
      %15 = sbr.rel (0) target = $region9
    $region8: #{tpu_custom_call.1} parent=1 // pred_region
      _
    $region9: #{tpu_custom_call.1} parent=1 // pred_fallthru
      _
    // Predicated region
    $region10: #{tpu_custom_call.1} parent=1 // pred_check
      _
    $region11: #{tpu_custom_call.1} parent=1 // pred_check_branch
      %17 = sbr.rel (0) target = $region13
    $region12: #{tpu_custom_call.1} parent=1 // pred_region
      _
    $region13: #{tpu_custom_call.1} parent=1 // pred_fallthru
      _
    // Predicated region
    $region14: #{tpu_custom_call.1} parent=1 // pred_check
      _
    $region15: #{tpu_custom_call.1} parent=1 // pred_check_branch
      %19 = sbr.rel (0) target = $region17
    $region16: #{tpu_custom_call.1} parent=1 // pred_region
      _
    $region17: #{tpu_custom_call.1} parent=1 // pred_fallthru
      _
    // Predicated region
    $region18: #{tpu_custom_call.1} parent=1 // pred_check
      _
    $region19: #{tpu_custom_call.1} parent=1 // pred_check_branch
      %21 = sbr.rel (0) target = $region21
    $region20: #{tpu_custom_call.1} parent=1 // pred_region
      _
    $region21: #{tpu_custom_call.1} parent=1 // pred_fallthru
      _
    // Predicated region
    $region22: #{tpu_custom_call.1} parent=1 // pred_check
      _
    $region23: #{tpu_custom_call.1} parent=1 // pred_check_branch
      %23 = sbr.rel (0) target = $region25
    $region24: #{tpu_custom_call.1} parent=1 // pred_region
      _
    $region25: #{tpu_custom_call.1} parent=1 // pred_fallthru
      _
    %v24 = vld [vmem:[%s0] sm:$0xff]
    %v25 = vld [vmem:[%s0 + $0x8] sm:$0xff]
    %v26 = vld [vmem:[%s1] sm:$0xf]
    %v27 = vld [vmem:[%s3] sm:$0x1]
    %v29 = vlaneseq
    %v30 = vshrl.u32 %v29, 7
    %v31 = vsub.s32 0, %v30
    %v32 = vrot.slane %v27, %v31
    %vm34 = vcmask 31744
    %v36 = vsel %vm34, %v24, 0
    %v39 = vsel %vm34, %v25, 0
    %vm41 = vcmask 1043456
    %v43 = vsel %vm41, %v26, 0
    %45 = vmatprep.subr.mxu0 0.0
    %46 = vmatpush1.msra.mxu0 %v43
    %47 = vmatprep.subr.mxu0 0.0
    %48 = vmatpush1.msra.mxu0 0.0
    %49 = vmatprep.subr.mxu0 0.0
    %50 = vmatpush1.msra.mxu0 0.0
    %51 = vmatprep.subr.mxu0 0.0
    %52 = vmatpush1.msra.mxu0 0.0
    %53 = vmatprep.subr.mxu0 0.0
    %54 = vmatpush1.msra.mxu0 0.0
    %55 = vmatprep.subr.mxu0 0.0
    %56 = vmatpush1.msra.mxu0 0.0
    %57 = vmatprep.subr.mxu0 0.0
    %58 = vmatpush1.msra.mxu0 0.0
    %59 = vmatprep.subr.mxu0 0.0
    %60 = vmatpush1.msra.mxu0 0.0
    %61 = vmatprep.subr.mxu0 0.0
    %62 = vmatpush1.msra.mxu0 0.0
    %63 = vmatprep.subr.mxu0 0.0
    %64 = vmatpush1.msra.mxu0 0.0
    %65 = vmatprep.subr.mxu0 0.0
    %66 = vmatpush1.msra.mxu0 0.0
    %67 = vmatprep.subr.mxu0 0.0
    %68 = vmatpush1.msra.mxu0 0.0
    %69 = vmatprep.subr.mxu0 0.0
    %70 = vmatpush1.msra.mxu0 0.0
    %71 = vmatprep.subr.mxu0 0.0
    %72 = vmatpush1.msra.mxu0 0.0
    %73 = vmatprep.subr.mxu0 0.0
    %74 = vmatpush1.msra.mxu0 0.0
    %75 = vmatprep.subr.mxu0 0.0
    %76 = vmatpush1.msra.mxu0 0.0
    %77 = vmatprep.subr.mxu0 0.0
    %78 = vmatpush1.msra.mxu0 0.0
    %79 = vmatprep.subr.mxu0 0.0
    %80 = vmatpush1.msra.mxu0 0.0
    %81 = vmatprep.subr.mxu0 0.0
    %82 = vmatpush1.msra.mxu0 0.0
    %83 = vmatprep.subr.mxu0 0.0
    %84 = vmatpush1.msra.mxu0 0.0
    %85 = vmatprep.subr.mxu0 0.0
    %86 = vmatpush1.msra.mxu0 0.0
    %87 = vmatprep.subr.mxu0 0.0
    %88 = vmatpush1.msra.mxu0 0.0
    %89 = vmatprep.subr.mxu0 0.0
    %90 = vmatpush1.msra.mxu0 0.0
    %91 = vmatprep.subr.mxu0 0.0
    %92 = vmatpush1.msra.mxu0 0.0
    %93 = vmatprep.subr.mxu0 0.0
    %94 = vmatpush1.msra.mxu0 0.0
    %95 = vmatprep.subr.mxu0 0.0
    %96 = vmatpush1.msra.mxu0 0.0
    %97 = vmatprep.subr.mxu0 0.0
    %98 = vmatpush1.msra.mxu0 0.0
    %99 = vmatprep.subr.mxu0 0.0
    %100 = vmatpush1.msra.mxu0 0.0
    %101 = vmatprep.subr.mxu0 0.0
    %102 = vmatpush1.msra.mxu0 0.0
    %103 = vmatprep.subr.mxu0 0.0
    %104 = vmatpush1.msra.mxu0 0.0
    %105 = vmatprep.subr.mxu0 0.0
    %106 = vmatpush1.msra.mxu0 0.0
    %107 = vmatprep.subr.mxu0 0.0
    %108 = vmatpush1.msra.mxu0 0.0
    %109 = vmatprep.mubr.f32.mxu0 0.0
    %110 = vmatmul.mubr.f32.gmra.mrb[0].mxu0 %v36
    %v111 = vpop.f32.mrb[0].mxu0
    %v112 = vadd.f32 %v32, %v111
    %v113 = vpop.f32.mrb[0].mxu0
    %114 = vmatprep.mubr.f32.mxu0 0.0
    %115 = vmatmul.mubr.f32.gmra.mrb[0].mxu0 %v39
    %v116 = vpop.f32.mrb[0].mxu0
    %v117 = vadd.f32 %v32, %v116
    %v118 = vpop.f32.mrb[0].mxu0
    %119 = vdwg.mxu0
    %v120 = vld [vmem:[%s2] sm:$0xff]
    %v121 = vld [vmem:[%s2 + $0x8] sm:$0xff]
    %v122 = vld [vmem:[%s2 + $0x10] sm:$0xff]
    %v123 = vld [vmem:[%s2 + $0x18] sm:$0xff]
    %v124 = vld [vmem:[%s2 + $0x20] sm:$0xff]
    %v125 = vld [vmem:[%s2 + $0x28] sm:$0xff]
    %v126 = vld [vmem:[%s2 + $0x30] sm:$0xff]
    %v127 = vld [vmem:[%s2 + $0x38] sm:$0xff]
    %v128 = vld [vmem:[%s2 + $0x40] sm:$0xff]
    %v129 = vld [vmem:[%s2 + $0x48] sm:$0xff]
    %v130 = vld [vmem:[%s2 + $0x50] sm:$0xff]
    %v131 = vld [vmem:[%s2 + $0x58] sm:$0xff]
    %v132 = vld [vmem:[%s2 + $0x60] sm:$0xff]
    %v133 = vld [vmem:[%s2 + $0x68] sm:$0xff]
    %v134 = vld [vmem:[%s2 + $0x70] sm:$0xff]
    %v135 = vld [vmem:[%s2 + $0x78] sm:$0xff]
    %v136 = vlaneseq
    %v137 = vand.u32 %v136, 127
    %vm138 = vcmp.ge.s32.totalorder %v137, 64
    %vm139 = vcmp.lt.s32.totalorder %v137, 96
    %vm140 = vmand %vm138, %vm139
    %141 = vmatprep.subr.mxu0 0.0
    %142 = vmatpush1.msra.mxu0 %v120
    %143 = vmatprep.subr.mxu0 0.0
    %144 = vmatpush1.msra.mxu0 %v121
    %145 = vmatprep.subr.mxu0 0.0
    %146 = vmatpush1.msra.mxu0 %v122
    %147 = vmatprep.subr.mxu0 0.0
    %148 = vmatpush1.msra.mxu0 %v123
    %149 = vmatprep.subr.mxu0 0.0
    %150 = vmatpush1.msra.mxu0 %v124
    %151 = vmatprep.subr.mxu0 0.0
    %152 = vmatpush1.msra.mxu0 %v125
    %153 = vmatprep.subr.mxu0 0.0
    %154 = vmatpush1.msra.mxu0 %v126
    %155 = vmatprep.subr.mxu0 0.0
    %156 = vmatpush1.msra.mxu0 %v127
    %157 = vmatprep.subr.mxu0 0.0
    %158 = vmatpush1.msra.mxu0 %v128
    %159 = vmatprep.subr.mxu0 0.0
    %160 = vmatpush1.msra.mxu0 %v129
    %161 = vmatprep.subr.mxu0 0.0
    %162 = vmatpush1.msra.mxu0 %v130
    %163 = vmatprep.subr.mxu0 0.0
    %164 = vmatpush1.msra.mxu0 %v131
    %165 = vmatprep.subr.mxu0 0.0
    %166 = vmatpush1.msra.mxu0 %v132
    %167 = vmatprep.subr.mxu0 0.0
    %168 = vmatpush1.msra.mxu0 %v133
    %169 = vmatprep.subr.mxu0 0.0
    %170 = vmatpush1.msra.mxu0 %v134
    %171 = vmatprep.subr.mxu0 0.0
    %172 = vmatpush1.msra.mxu0 %v135
    %173 = vmatprep.subr.mxu0 0.0
    %174 = vmatpush1.msra.mxu0 0.0
    %175 = vmatprep.subr.mxu0 0.0
    %176 = vmatpush1.msra.mxu0 0.0
    %177 = vmatprep.subr.mxu0 0.0
    %178 = vmatpush1.msra.mxu0 0.0
    %179 = vmatprep.subr.mxu0 0.0
    %180 = vmatpush1.msra.mxu0 0.0
    %181 = vmatprep.subr.mxu0 0.0
    %182 = vmatpush1.msra.mxu0 0.0
    %183 = vmatprep.subr.mxu0 0.0
    %184 = vmatpush1.msra.mxu0 0.0
    %185 = vmatprep.subr.mxu0 0.0
    %186 = vmatpush1.msra.mxu0 0.0
    %187 = vmatprep.subr.mxu0 0.0
    %188 = vmatpush1.msra.mxu0 0.0
    %189 = vmatprep.subr.mxu0 0.0
    %190 = vmatpush1.msra.mxu0 0.0
    %191 = vmatprep.subr.mxu0 0.0
    %192 = vmatpush1.msra.mxu0 0.0
    %193 = vmatprep.subr.mxu0 0.0
    %194 = vmatpush1.msra.mxu0 0.0
    %195 = vmatprep.subr.mxu0 0.0
    %196 = vmatpush1.msra.mxu0 0.0
    %197 = vmatprep.subr.mxu0 0.0
    %198 = vmatpush1.msra.mxu0 0.0
    %199 = vmatprep.subr.mxu0 0.0
    %200 = vmatpush1.msra.mxu0 0.0
    %201 = vmatprep.subr.mxu0 0.0
    %202 = vmatpush1.msra.mxu0 0.0
    %203 = vmatprep.subr.mxu0 0.0
    %204 = vmatpush1.msra.mxu0 0.0
    %205 = vmatprep.mubr.f32.mxu0 0.0
    %206 = vmatmul.mubr.f32.gmra.mrb[0].mxu0 0.0
    %v207 = vpop.f32.mrb[0].mxu0
    %v208 = vadd.f32 0.0, %v207
    %v209 = vpop.f32.mrb[0].mxu0
    %210 = vdwg.mxu0
    %v212 = vrot.slane %v208, 1
    %v215 = vadd.f32 %v112, %v208
    %v216 = vadd.f32 %v117, %v212
    %v217 = vtanh.pop %v215
    %v218 = vtanh.pop %v216
    %v219 = vxor.u32 %v215, 2147483648
    %v220 = vxor.u32 %v216, 2147483648
    %v221 = vmul.f32 %v219, 1.442695
    %v222 = vpow.pop %v221
    %v223 = vmul.f32 %v220, 1.442695
    %v224 = vpow.pop %v223
    %v225 = vadd.f32 %v222, 1.0
    %v226 = vadd.f32 %v224, 1.0
    %v227 = vrcp.pop %v225
    %v228 = vmul.f32 1.0, %v227
    %v229 = vrcp.pop %v226
    %v230 = vmul.f32 1.0, %v229
    %v233 = vrot.slane %v218, 7
    %vm234 = vcmask 1041409
    %v235 = vsel %vm234, %v233, %v217
    %v239 = vrot.slane %v230, 7
    %v240 = vsel %vm234, %v239, %v228
    %v242 = vsel %vm140, %v235, %v240
    %243 = vrot.lane.b32.xlu0 %v242, 96
    %v244 = vpop.permute.xlu0 %243
    %245 = vrot.lane.b32.xlu0 %v242, 64
    %v246 = vpop.permute.xlu0 %245
    %247 = vrot.lane.b32.xlu0 %v242, 32
    %v248 = vpop.permute.xlu0 %247
    %v249 = vmul.f32 %v244, 0.0
    %v250 = vmul.f32 %v242, %v246
    %v251 = vadd.f32 %v249, %v250
    %v252 = vtanh.pop %v251
    %v253 = vmul.f32 %v248, %v252
    %254 = vmatprep.subr.mxu0 0.0
    %255 = vmatpush1.msra.mxu0 %v120
    %256 = vmatprep.subr.mxu0 0.0
    %257 = vmatpush1.msra.mxu0 %v121
    %258 = vmatprep.subr.mxu0 0.0
    %259 = vmatpush1.msra.mxu0 %v122
    %260 = vmatprep.subr.mxu0 0.0
    %261 = vmatpush1.msra.mxu0 %v123
    %262 = vmatprep.subr.mxu0 0.0
    %263 = vmatpush1.msra.mxu0 %v124
    %264 = vmatprep.subr.mxu0 0.0
    %265 = vmatpush1.msra.mxu0 %v125
    %266 = vmatprep.subr.mxu0 0.0
    %267 = vmatpush1.msra.mxu0 %v126
    %268 = vmatprep.subr.mxu0 0.0
    %269 = vmatpush1.msra.mxu0 %v127
    %270 = vmatprep.subr.mxu0 0.0
    %271 = vmatpush1.msra.mxu0 %v128
    %272 = vmatprep.subr.mxu0 0.0
    %273 = vmatpush1.msra.mxu0 %v129
    %274 = vmatprep.subr.mxu0 0.0
    %275 = vmatpush1.msra.mxu0 %v130
    %276 = vmatprep.subr.mxu0 0.0
    %277 = vmatpush1.msra.mxu0 %v131
    %278 = vmatprep.subr.mxu0 0.0
    %279 = vmatpush1.msra.mxu0 %v132
    %280 = vmatprep.subr.mxu0 0.0
    %281 = vmatpush1.msra.mxu0 %v133
    %282 = vmatprep.subr.mxu0 0.0
    %283 = vmatpush1.msra.mxu0 %v134
    %284 = vmatprep.subr.mxu0 0.0
    %285 = vmatpush1.msra.mxu0 %v135
    %286 = vmatprep.subr.mxu0 0.0
    %287 = vmatpush1.msra.mxu0 0.0
    %288 = vmatprep.subr.mxu0 0.0
    %289 = vmatpush1.msra.mxu0 0.0
    %290 = vmatprep.subr.mxu0 0.0
    %291 = vmatpush1.msra.mxu0 0.0
    %292 = vmatprep.subr.mxu0 0.0
    %293 = vmatpush1.msra.mxu0 0.0
    %294 = vmatprep.subr.mxu0 0.0
    %295 = vmatpush1.msra.mxu0 0.0
    %296 = vmatprep.subr.mxu0 0.0
    %297 = vmatpush1.msra.mxu0 0.0
    %298 = vmatprep.subr.mxu0 0.0
    %299 = vmatpush1.msra.mxu0 0.0
    %300 = vmatprep.subr.mxu0 0.0
    %301 = vmatpush1.msra.mxu0 0.0
    %302 = vmatprep.subr.mxu0 0.0
    %303 = vmatpush1.msra.mxu0 0.0
    %304 = vmatprep.subr.mxu0 0.0
    %305 = vmatpush1.msra.mxu0 0.0
    %306 = vmatprep.subr.mxu0 0.0
    %307 = vmatpush1.msra.mxu0 0.0
    %308 = vmatprep.subr.mxu0 0.0
    %309 = vmatpush1.msra.mxu0 0.0
    %310 = vmatprep.subr.mxu0 0.0
    %311 = vmatpush1.msra.mxu0 0.0
    %312 = vmatprep.subr.mxu0 0.0
    %313 = vmatpush1.msra.mxu0 0.0
    %314 = vmatprep.subr.mxu0 0.0
    %315 = vmatpush1.msra.mxu0 0.0
    %316 = vmatprep.subr.mxu0 0.0
    %317 = vmatpush1.msra.mxu0 0.0
    %318 = vmatprep.mubr.f32.mxu0 0.0
    %319 = vmatmul.mubr.f32.gmra.mrb[0].mxu0 %v253
    %v320 = vpop.f32.mrb[0].mxu0
    %v321 = vadd.f32 0.0, %v320
    %v322 = vpop.f32.mrb[0].mxu0
    %323 = vdwg.mxu0
    %v325 = vrot.slane %v321, 7
    %v328 = vadd.f32 %v112, %v325
    %v329 = vadd.f32 %v117, %v321
    %v330 = vtanh.pop %v328
    %v331 = vtanh.pop %v329
    %v332 = vxor.u32 %v328, 2147483648
    %v333 = vxor.u32 %v329, 2147483648
    %v334 = vmul.f32 %v332, 1.442695
    %v335 = vpow.pop %v334
    %v336 = vmul.f32 %v333, 1.442695
    %v337 = vpow.pop %v336
    %v338 = vadd.f32 %v335, 1.0
    %v339 = vadd.f32 %v337, 1.0
    %v340 = vrcp.pop %v338
    %v341 = vmul.f32 1.0, %v340
    %v342 = vrcp.pop %v339
    %v343 = vmul.f32 1.0, %v342
    %v346 = vrot.slane %v330, 1
    %v347 = vsel %vm234, %v331, %v346
    %v351 = vrot.slane %v341, 1
    %v352 = vsel %vm234, %v343, %v351
    %v354 = vsel %vm140, %v347, %v352
    %355 = vrot.lane.b32.xlu0 %v354, 96
    %v356 = vpop.permute.xlu0 %355
    %357 = vrot.lane.b32.xlu0 %v354, 64
    %v358 = vpop.permute.xlu0 %357
    %359 = vrot.lane.b32.xlu0 %v354, 32
    %v360 = vpop.permute.xlu0 %359
    %v361 = vmul.f32 %v356, %v251
    %v362 = vmul.f32 %v354, %v358
    %v363 = vadd.f32 %v361, %v362
    %v364 = vtanh.pop %v363
    %v365 = vmul.f32 %v360, %v364
    %366 = vmatprep.subr.mxu0 0.0
    %367 = vmatpush1.msra.mxu0 %v120
    %368 = vmatprep.subr.mxu0 0.0
    %369 = vmatpush1.msra.mxu0 %v121
    %370 = vmatprep.subr.mxu0 0.0
    %371 = vmatpush1.msra.mxu0 %v122
    %372 = vmatprep.subr.mxu0 0.0
    %373 = vmatpush1.msra.mxu0 %v123
    %374 = vmatprep.subr.mxu0 0.0
    %375 = vmatpush1.msra.mxu0 %v124
    %376 = vmatprep.subr.mxu0 0.0
    %377 = vmatpush1.msra.mxu0 %v125
    %378 = vmatprep.subr.mxu0 0.0
    %379 = vmatpush1.msra.mxu0 %v126
    %380 = vmatprep.subr.mxu0 0.0
    %381 = vmatpush1.msra.mxu0 %v127
    %382 = vmatprep.subr.mxu0 0.0
    %383 = vmatpush1.msra.mxu0 %v128
    %384 = vmatprep.subr.mxu0 0.0
    %385 = vmatpush1.msra.mxu0 %v129
    %386 = vmatprep.subr.mxu0 0.0
    %387 = vmatpush1.msra.mxu0 %v130
    %388 = vmatprep.subr.mxu0 0.0
    %389 = vmatpush1.msra.mxu0 %v131
    %390 = vmatprep.subr.mxu0 0.0
    %391 = vmatpush1.msra.mxu0 %v132
    %392 = vmatprep.subr.mxu0 0.0
    %393 = vmatpush1.msra.mxu0 %v133
    %394 = vmatprep.subr.mxu0 0.0
    %395 = vmatpush1.msra.mxu0 %v134
    %396 = vmatprep.subr.mxu0 0.0
    %397 = vmatpush1.msra.mxu0 %v135
    %398 = vmatprep.subr.mxu0 0.0
    %399 = vmatpush1.msra.mxu0 0.0
    %400 = vmatprep.subr.mxu0 0.0
    %401 = vmatpush1.msra.mxu0 0.0
    %402 = vmatprep.subr.mxu0 0.0
    %403 = vmatpush1.msra.mxu0 0.0
    %404 = vmatprep.subr.mxu0 0.0
    %405 = vmatpush1.msra.mxu0 0.0
    %406 = vmatprep.subr.mxu0 0.0
    %407 = vmatpush1.msra.mxu0 0.0
    %408 = vmatprep.subr.mxu0 0.0
    %409 = vmatpush1.msra.mxu0 0.0
    %410 = vmatprep.subr.mxu0 0.0
    %411 = vmatpush1.msra.mxu0 0.0
    %412 = vmatprep.subr.mxu0 0.0
    %413 = vmatpush1.msra.mxu0 0.0
    %414 = vmatprep.subr.mxu0 0.0
    %415 = vmatpush1.msra.mxu0 0.0
    %416 = vmatprep.subr.mxu0 0.0
    %417 = vmatpush1.msra.mxu0 0.0
    %418 = vmatprep.subr.mxu0 0.0
    %419 = vmatpush1.msra.mxu0 0.0
    %420 = vmatprep.subr.mxu0 0.0
    %421 = vmatpush1.msra.mxu0 0.0
    %422 = vmatprep.subr.mxu0 0.0
    %423 = vmatpush1.msra.mxu0 0.0
    %424 = vmatprep.subr.mxu0 0.0
    %425 = vmatpush1.msra.mxu0 0.0
    %426 = vmatprep.subr.mxu0 0.0
    %427 = vmatpush1.msra.mxu0 0.0
    %428 = vmatprep.subr.mxu0 0.0
    %429 = vmatpush1.msra.mxu0 0.0
    %430 = vmatprep.mubr.f32.mxu0 0.0
    %431 = vmatmul.mubr.f32.gmra.mrb[0].mxu0 %v365
    %v432 = vpop.f32.mrb[0].mxu0
    %v433 = vadd.f32 0.0, %v432
    %v434 = vpop.f32.mrb[0].mxu0
    %435 = vdwg.mxu0
    %v437 = vrot.slane %v433, 6
    %v438 = vrot.slane %v433, 7
    %v441 = vadd.f32 %v112, %v437
    %v442 = vadd.f32 %v117, %v438
    %v443 = vtanh.pop %v441
    %v444 = vtanh.pop %v442
    %v445 = vxor.u32 %v441, 2147483648
    %v446 = vxor.u32 %v442, 2147483648
    %v447 = vmul.f32 %v445, 1.442695
    %v448 = vpow.pop %v447
    %v449 = vmul.f32 %v446, 1.442695
    %v450 = vpow.pop %v449
    %v451 = vadd.f32 %v448, 1.0
    %v452 = vadd.f32 %v450, 1.0
    %v453 = vrcp.pop %v451
    %v454 = vmul.f32 1.0, %v453
    %v455 = vrcp.pop %v452
    %v456 = vmul.f32 1.0, %v455
    %v459 = vrot.slane %v443, 2
    %v460 = vrot.slane %v444, 1
    %v461 = vsel %vm234, %v460, %v459
    %v465 = vrot.slane %v454, 2
    %v466 = vrot.slane %v456, 1
    %v467 = vsel %vm234, %v466, %v465
    %v469 = vsel %vm140, %v461, %v467
    %470 = vrot.lane.b32.xlu0 %v469, 96
    %v471 = vpop.permute.xlu0 %470
    %472 = vrot.lane.b32.xlu0 %v469, 64
    %v473 = vpop.permute.xlu0 %472
    %474 = vrot.lane.b32.xlu0 %v469, 32
    %v475 = vpop.permute.xlu0 %474
    %v476 = vmul.f32 %v471, %v363
    %v477 = vmul.f32 %v469, %v473
    %v478 = vadd.f32 %v476, %v477
    %v479 = vtanh.pop %v478
    %v480 = vmul.f32 %v475, %v479
    %481 = vmatprep.subr.mxu0 0.0
    %482 = vmatpush1.msra.mxu0 %v120
    %483 = vmatprep.subr.mxu0 0.0
    %484 = vmatpush1.msra.mxu0 %v121
    %485 = vmatprep.subr.mxu0 0.0
    %486 = vmatpush1.msra.mxu0 %v122
    %487 = vmatprep.subr.mxu0 0.0
    %488 = vmatpush1.msra.mxu0 %v123
    %489 = vmatprep.subr.mxu0 0.0
    %490 = vmatpush1.msra.mxu0 %v124
    %491 = vmatprep.subr.mxu0 0.0
    %492 = vmatpush1.msra.mxu0 %v125
    %493 = vmatprep.subr.mxu0 0.0
    %494 = vmatpush1.msra.mxu0 %v126
    %495 = vmatprep.subr.mxu0 0.0
    %496 = vmatpush1.msra.mxu0 %v127
    %497 = vmatprep.subr.mxu0 0.0
    %498 = vmatpush1.msra.mxu0 %v128
    %499 = vmatprep.subr.mxu0 0.0
    %500 = vmatpush1.msra.mxu0 %v129
    %501 = vmatprep.subr.mxu0 0.0
    %502 = vmatpush1.msra.mxu0 %v130
    %503 = vmatprep.subr.mxu0 0.0
    %504 = vmatpush1.msra.mxu0 %v131
    %505 = vmatprep.subr.mxu0 0.0
    %506 = vmatpush1.msra.mxu0 %v132
    %507 = vmatprep.subr.mxu0 0.0
    %508 = vmatpush1.msra.mxu0 %v133
    %509 = vmatprep.subr.mxu0 0.0
    %510 = vmatpush1.msra.mxu0 %v134
    %511 = vmatprep.subr.mxu0 0.0
    %512 = vmatpush1.msra.mxu0 %v135
    %513 = vmatprep.subr.mxu0 0.0
    %514 = vmatpush1.msra.mxu0 0.0
    %515 = vmatprep.subr.mxu0 0.0
    %516 = vmatpush1.msra.mxu0 0.0
    %517 = vmatprep.subr.mxu0 0.0
    %518 = vmatpush1.msra.mxu0 0.0
    %519 = vmatprep.subr.mxu0 0.0
    %520 = vmatpush1.msra.mxu0 0.0
    %521 = vmatprep.subr.mxu0 0.0
    %522 = vmatpush1.msra.mxu0 0.0
    %523 = vmatprep.subr.mxu0 0.0
    %524 = vmatpush1.msra.mxu0 0.0
    %525 = vmatprep.subr.mxu0 0.0
    %526 = vmatpush1.msra.mxu0 0.0
    %527 = vmatprep.subr.mxu0 0.0
    %528 = vmatpush1.msra.mxu0 0.0
    %529 = vmatprep.subr.mxu0 0.0
    %530 = vmatpush1.msra.mxu0 0.0
    %531 = vmatprep.subr.mxu0 0.0
    %532 = vmatpush1.msra.mxu0 0.0
    %533 = vmatprep.subr.mxu0 0.0
    %534 = vmatpush1.msra.mxu0 0.0
    %535 = vmatprep.subr.mxu0 0.0
    %536 = vmatpush1.msra.mxu0 0.0
    %537 = vmatprep.subr.mxu0 0.0
    %538 = vmatpush1.msra.mxu0 0.0
    %539 = vmatprep.subr.mxu0 0.0
    %540 = vmatpush1.msra.mxu0 0.0
    %541 = vmatprep.subr.mxu0 0.0
    %542 = vmatpush1.msra.mxu0 0.0
    %543 = vmatprep.subr.mxu0 0.0
    %544 = vmatpush1.msra.mxu0 0.0
    %545 = vmatprep.mubr.f32.mxu0 0.0
    %546 = vmatmul.mubr.f32.gmra.mrb[0].mxu0 %v480
    %v547 = vpop.f32.mrb[0].mxu0
    %v548 = vadd.f32 0.0, %v547
    %v549 = vpop.f32.mrb[0].mxu0
    %550 = vdwg.mxu0
    %v552 = vrot.slane %v548, 5
    %v553 = vrot.slane %v548, 6
    %v556 = vadd.f32 %v112, %v552
    %v557 = vadd.f32 %v117, %v553
    %v558 = vtanh.pop %v556
    %v559 = vtanh.pop %v557
    %v560 = vxor.u32 %v556, 2147483648
    %v561 = vxor.u32 %v557, 2147483648
    %v562 = vmul.f32 %v560, 1.442695
    %v563 = vpow.pop %v562
    %v564 = vmul.f32 %v561, 1.442695
    %v565 = vpow.pop %v564
    %v566 = vadd.f32 %v563, 1.0
    %v567 = vadd.f32 %v565, 1.0
    %v568 = vrcp.pop %v566
    %v569 = vmul.f32 1.0, %v568
    %v570 = vrcp.pop %v567
    %v571 = vmul.f32 1.0, %v570
    %v574 = vrot.slane %v558, 3
    %v575 = vrot.slane %v559, 2
    %v576 = vsel %vm234, %v575, %v574
    %v580 = vrot.slane %v569, 3
    %v581 = vrot.slane %v571, 2
    %v582 = vsel %vm234, %v581, %v580
    %v584 = vsel %vm140, %v576, %v582
    %585 = vrot.lane.b32.xlu0 %v584, 96
    %v586 = vpop.permute.xlu0 %585
    %587 = vrot.lane.b32.xlu0 %v584, 64
    %v588 = vpop.permute.xlu0 %587
    %589 = vrot.lane.b32.xlu0 %v584, 32
    %v590 = vpop.permute.xlu0 %589
    %v591 = vmul.f32 %v586, %v478
    %v592 = vmul.f32 %v584, %v588
    %v593 = vadd.f32 %v591, %v592
    %v594 = vtanh.pop %v593
    %v595 = vmul.f32 %v590, %v594
    %596 = vmatprep.subr.mxu0 0.0
    %597 = vmatpush1.msra.mxu0 %v120
    %598 = vmatprep.subr.mxu0 0.0
    %599 = vmatpush1.msra.mxu0 %v121
    %600 = vmatprep.subr.mxu0 0.0
    %601 = vmatpush1.msra.mxu0 %v122
    %602 = vmatprep.subr.mxu0 0.0
    %603 = vmatpush1.msra.mxu0 %v123
    %604 = vmatprep.subr.mxu0 0.0
    %605 = vmatpush1.msra.mxu0 %v124
    %606 = vmatprep.subr.mxu0 0.0
    %607 = vmatpush1.msra.mxu0 %v125
    %608 = vmatprep.subr.mxu0 0.0
    %609 = vmatpush1.msra.mxu0 %v126
    %610 = vmatprep.subr.mxu0 0.0
    %611 = vmatpush1.msra.mxu0 %v127
    %612 = vmatprep.subr.mxu0 0.0
    %613 = vmatpush1.msra.mxu0 %v128
    %614 = vmatprep.subr.mxu0 0.0
    %615 = vmatpush1.msra.mxu0 %v129
    %616 = vmatprep.subr.mxu0 0.0
    %617 = vmatpush1.msra.mxu0 %v130
    %618 = vmatprep.subr.mxu0 0.0
    %619 = vmatpush1.msra.mxu0 %v131
    %620 = vmatprep.subr.mxu0 0.0
    %621 = vmatpush1.msra.mxu0 %v132
    %622 = vmatprep.subr.mxu0 0.0
    %623 = vmatpush1.msra.mxu0 %v133
    %624 = vmatprep.subr.mxu0 0.0
    %625 = vmatpush1.msra.mxu0 %v134
    %626 = vmatprep.subr.mxu0 0.0
    %627 = vmatpush1.msra.mxu0 %v135
    %628 = vmatprep.subr.mxu0 0.0
    %629 = vmatpush1.msra.mxu0 0.0
    %630 = vmatprep.subr.mxu0 0.0
    %631 = vmatpush1.msra.mxu0 0.0
    %632 = vmatprep.subr.mxu0 0.0
    %633 = vmatpush1.msra.mxu0 0.0
    %634 = vmatprep.subr.mxu0 0.0
    %635 = vmatpush1.msra.mxu0 0.0
    %636 = vmatprep.subr.mxu0 0.0
    %637 = vmatpush1.msra.mxu0 0.0
    %638 = vmatprep.subr.mxu0 0.0
    %639 = vmatpush1.msra.mxu0 0.0
    %640 = vmatprep.subr.mxu0 0.0
    %641 = vmatpush1.msra.mxu0 0.0
    %642 = vmatprep.subr.mxu0 0.0
    %643 = vmatpush1.msra.mxu0 0.0
    %644 = vmatprep.subr.mxu0 0.0
    %645 = vmatpush1.msra.mxu0 0.0
    %646 = vmatprep.subr.mxu0 0.0
    %647 = vmatpush1.msra.mxu0 0.0
    %648 = vmatprep.subr.mxu0 0.0
    %649 = vmatpush1.msra.mxu0 0.0
    %650 = vmatprep.subr.mxu0 0.0
    %651 = vmatpush1.msra.mxu0 0.0
    %652 = vmatprep.subr.mxu0 0.0
    %653 = vmatpush1.msra.mxu0 0.0
    %654 = vmatprep.subr.mxu0 0.0
    %655 = vmatpush1.msra.mxu0 0.0
    %656 = vmatprep.subr.mxu0 0.0
    %657 = vmatpush1.msra.mxu0 0.0
    %658 = vmatprep.subr.mxu0 0.0
    %659 = vmatpush1.msra.mxu0 0.0
    %660 = vmatprep.mubr.f32.mxu0 0.0
    %661 = vmatmul.mubr.f32.gmra.mrb[0].mxu0 %v595
    %v662 = vpop.f32.mrb[0].mxu0
    %v663 = vadd.f32 0.0, %v662
    %v664 = vpop.f32.mrb[0].mxu0
    %665 = vdwg.mxu0
    %v667 = vrot.slane %v663, 4
    %v668 = vrot.slane %v663, 5
    %v671 = vadd.f32 %v112, %v667
    %v672 = vadd.f32 %v117, %v668
    %v673 = vtanh.pop %v671
    %v674 = vtanh.pop %v672
    %v675 = vxor.u32 %v671, 2147483648
    %v676 = vxor.u32 %v672, 2147483648
    %v677 = vmul.f32 %v675, 1.442695
    %v678 = vpow.pop %v677
    %v679 = vmul.f32 %v676, 1.442695
    %v680 = vpow.pop %v679
    %v681 = vadd.f32 %v678, 1.0
    %v682 = vadd.f32 %v680, 1.0
    %v683 = vrcp.pop %v681
    %v684 = vmul.f32 1.0, %v683
    %v685 = vrcp.pop %v682
    %v686 = vmul.f32 1.0, %v685
    %v689 = vrot.slane %v673, 4
    %v690 = vrot.slane %v674, 3
    %v691 = vsel %vm234, %v690, %v689
    %v695 = vrot.slane %v684, 4
    %v696 = vrot.slane %v686, 3
    %v697 = vsel %vm234, %v696, %v695
    %v699 = vsel %vm140, %v691, %v697
    %700 = vrot.lane.b32.xlu0 %v699, 96
    %v701 = vpop.permute.xlu0 %700
    %702 = vrot.lane.b32.xlu0 %v699, 64
    %v703 = vpop.permute.xlu0 %702
    %704 = vrot.lane.b32.xlu0 %v699, 32
    %v705 = vpop.permute.xlu0 %704
    %v706 = vmul.f32 %v701, %v593
    %v707 = vmul.f32 %v699, %v703
    %v708 = vadd.f32 %v706, %v707
    %v709 = vtanh.pop %v708
    %v710 = vmul.f32 %v705, %v709
    %711 = vmatprep.subr.mxu0 0.0
    %712 = vmatpush1.msra.mxu0 %v120
    %713 = vmatprep.subr.mxu0 0.0
    %714 = vmatpush1.msra.mxu0 %v121
    %715 = vmatprep.subr.mxu0 0.0
    %716 = vmatpush1.msra.mxu0 %v122
    %717 = vmatprep.subr.mxu0 0.0
    %718 = vmatpush1.msra.mxu0 %v123
    %719 = vmatprep.subr.mxu0 0.0
    %720 = vmatpush1.msra.mxu0 %v124
    %721 = vmatprep.subr.mxu0 0.0
    %722 = vmatpush1.msra.mxu0 %v125
    %723 = vmatprep.subr.mxu0 0.0
    %724 = vmatpush1.msra.mxu0 %v126
    %725 = vmatprep.subr.mxu0 0.0
    %726 = vmatpush1.msra.mxu0 %v127
    %727 = vmatprep.subr.mxu0 0.0
    %728 = vmatpush1.msra.mxu0 %v128
    %729 = vmatprep.subr.mxu0 0.0
    %730 = vmatpush1.msra.mxu0 %v129
    %731 = vmatprep.subr.mxu0 0.0
    %732 = vmatpush1.msra.mxu0 %v130
    %733 = vmatprep.subr.mxu0 0.0
    %734 = vmatpush1.msra.mxu0 %v131
    %735 = vmatprep.subr.mxu0 0.0
    %736 = vmatpush1.msra.mxu0 %v132
    %737 = vmatprep.subr.mxu0 0.0
    %738 = vmatpush1.msra.mxu0 %v133
    %739 = vmatprep.subr.mxu0 0.0
    %740 = vmatpush1.msra.mxu0 %v134
    %741 = vmatprep.subr.mxu0 0.0
    %742 = vmatpush1.msra.mxu0 %v135
    %743 = vmatprep.subr.mxu0 0.0
    %744 = vmatpush1.msra.mxu0 0.0
    %745 = vmatprep.subr.mxu0 0.0
    %746 = vmatpush1.msra.mxu0 0.0
    %747 = vmatprep.subr.mxu0 0.0
    %748 = vmatpush1.msra.mxu0 0.0
    %749 = vmatprep.subr.mxu0 0.0
    %750 = vmatpush1.msra.mxu0 0.0
    %751 = vmatprep.subr.mxu0 0.0
    %752 = vmatpush1.msra.mxu0 0.0
    %753 = vmatprep.subr.mxu0 0.0
    %754 = vmatpush1.msra.mxu0 0.0
    %755 = vmatprep.subr.mxu0 0.0
    %756 = vmatpush1.msra.mxu0 0.0
    %757 = vmatprep.subr.mxu0 0.0
    %758 = vmatpush1.msra.mxu0 0.0
    %759 = vmatprep.subr.mxu0 0.0
    %760 = vmatpush1.msra.mxu0 0.0
    %761 = vmatprep.subr.mxu0 0.0
    %762 = vmatpush1.msra.mxu0 0.0
    %763 = vmatprep.subr.mxu0 0.0
    %764 = vmatpush1.msra.mxu0 0.0
    %765 = vmatprep.subr.mxu0 0.0
    %766 = vmatpush1.msra.mxu0 0.0
    %767 = vmatprep.subr.mxu0 0.0
    %768 = vmatpush1.msra.mxu0 0.0
    %769 = vmatprep.subr.mxu0 0.0
    %770 = vmatpush1.msra.mxu0 0.0
    %771 = vmatprep.subr.mxu0 0.0
    %772 = vmatpush1.msra.mxu0 0.0
    %773 = vmatprep.subr.mxu0 0.0
    %774 = vmatpush1.msra.mxu0 0.0
    %775 = vmatprep.mubr.f32.mxu0 0.0
    %776 = vmatmul.mubr.f32.gmra.mrb[0].mxu0 %v710
    %v777 = vpop.f32.mrb[0].mxu0
    %v778 = vadd.f32 0.0, %v777
    %v779 = vpop.f32.mrb[0].mxu0
    %780 = vdwg.mxu0
    %v782 = vrot.slane %v778, 3
    %v783 = vrot.slane %v778, 4
    %v786 = vadd.f32 %v112, %v782
    %v787 = vadd.f32 %v117, %v783
    %v788 = vtanh.pop %v786
    %v789 = vtanh.pop %v787
    %v790 = vxor.u32 %v786, 2147483648
    %v791 = vxor.u32 %v787, 2147483648
    %v792 = vmul.f32 %v790, 1.442695
    %v793 = vpow.pop %v792
    %v794 = vmul.f32 %v791, 1.442695
    %v795 = vpow.pop %v794
    %v796 = vadd.f32 %v793, 1.0
    %v797 = vadd.f32 %v795, 1.0
    %v798 = vrcp.pop %v796
    %v799 = vmul.f32 1.0, %v798
    %v800 = vrcp.pop %v797
    %v801 = vmul.f32 1.0, %v800
    %v804 = vrot.slane %v788, 5
    %v805 = vrot.slane %v789, 4
    %v806 = vsel %vm234, %v805, %v804
    %v810 = vrot.slane %v799, 5
    %v811 = vrot.slane %v801, 4
    %v812 = vsel %vm234, %v811, %v810
    %v814 = vsel %vm140, %v806, %v812
    %815 = vrot.lane.b32.xlu0 %v814, 96
    %v816 = vpop.permute.xlu0 %815
    %817 = vrot.lane.b32.xlu0 %v814, 64
    %v818 = vpop.permute.xlu0 %817
    %819 = vrot.lane.b32.xlu0 %v814, 32
    %v820 = vpop.permute.xlu0 %819
    %v821 = vmul.f32 %v816, %v708
    %v822 = vmul.f32 %v814, %v818
    %v823 = vadd.f32 %v821, %v822
    %v824 = vtanh.pop %v823
    %v825 = vmul.f32 %v820, %v824
    %826 = vmatprep.subr.mxu0 0.0
    %827 = vmatpush1.msra.mxu0 %v120
    %828 = vmatprep.subr.mxu0 0.0
    %829 = vmatpush1.msra.mxu0 %v121
    %830 = vmatprep.subr.mxu0 0.0
    %831 = vmatpush1.msra.mxu0 %v122
    %832 = vmatprep.subr.mxu0 0.0
    %833 = vmatpush1.msra.mxu0 %v123
    %834 = vmatprep.subr.mxu0 0.0
    %835 = vmatpush1.msra.mxu0 %v124
    %836 = vmatprep.subr.mxu0 0.0
    %837 = vmatpush1.msra.mxu0 %v125
    %838 = vmatprep.subr.mxu0 0.0
    %839 = vmatpush1.msra.mxu0 %v126
    %840 = vmatprep.subr.mxu0 0.0
    %841 = vmatpush1.msra.mxu0 %v127
    %842 = vmatprep.subr.mxu0 0.0
    %843 = vmatpush1.msra.mxu0 %v128
    %844 = vmatprep.subr.mxu0 0.0
    %845 = vmatpush1.msra.mxu0 %v129
    %846 = vmatprep.subr.mxu0 0.0
    %847 = vmatpush1.msra.mxu0 %v130
    %848 = vmatprep.subr.mxu0 0.0
    %849 = vmatpush1.msra.mxu0 %v131
    %850 = vmatprep.subr.mxu0 0.0
    %851 = vmatpush1.msra.mxu0 %v132
    %852 = vmatprep.subr.mxu0 0.0
    %853 = vmatpush1.msra.mxu0 %v133
    %854 = vmatprep.subr.mxu0 0.0
    %855 = vmatpush1.msra.mxu0 %v134
    %856 = vmatprep.subr.mxu0 0.0
    %857 = vmatpush1.msra.mxu0 %v135
    %858 = vmatprep.subr.mxu0 0.0
    %859 = vmatpush1.msra.mxu0 0.0
    %860 = vmatprep.subr.mxu0 0.0
    %861 = vmatpush1.msra.mxu0 0.0
    %862 = vmatprep.subr.mxu0 0.0
    %863 = vmatpush1.msra.mxu0 0.0
    %864 = vmatprep.subr.mxu0 0.0
    %865 = vmatpush1.msra.mxu0 0.0
    %866 = vmatprep.subr.mxu0 0.0
    %867 = vmatpush1.msra.mxu0 0.0
    %868 = vmatprep.subr.mxu0 0.0
    %869 = vmatpush1.msra.mxu0 0.0
    %870 = vmatprep.subr.mxu0 0.0
    %871 = vmatpush1.msra.mxu0 0.0
    %872 = vmatprep.subr.mxu0 0.0
    %873 = vmatpush1.msra.mxu0 0.0
    %874 = vmatprep.subr.mxu0 0.0
    %875 = vmatpush1.msra.mxu0 0.0
    %876 = vmatprep.subr.mxu0 0.0
    %877 = vmatpush1.msra.mxu0 0.0
    %878 = vmatprep.subr.mxu0 0.0
    %879 = vmatpush1.msra.mxu0 0.0
    %880 = vmatprep.subr.mxu0 0.0
    %881 = vmatpush1.msra.mxu0 0.0
    %882 = vmatprep.subr.mxu0 0.0
    %883 = vmatpush1.msra.mxu0 0.0
    %884 = vmatprep.subr.mxu0 0.0
    %885 = vmatpush1.msra.mxu0 0.0
    %886 = vmatprep.subr.mxu0 0.0
    %887 = vmatpush1.msra.mxu0 0.0
    %888 = vmatprep.subr.mxu0 0.0
    %889 = vmatpush1.msra.mxu0 0.0
    %890 = vmatprep.mubr.f32.mxu0 0.0
    %891 = vmatmul.mubr.f32.gmra.mrb[0].mxu0 %v825
    %v892 = vpop.f32.mrb[0].mxu0
    %v893 = vadd.f32 0.0, %v892
    %v894 = vpop.f32.mrb[0].mxu0
    %895 = vdwg.mxu0
    %v897 = vrot.slane %v893, 2
    %v898 = vrot.slane %v893, 3
    %v901 = vadd.f32 %v112, %v897
    %v902 = vadd.f32 %v117, %v898
    %v903 = vtanh.pop %v901
    %v904 = vtanh.pop %v902
    %v905 = vxor.u32 %v901, 2147483648
    %v906 = vxor.u32 %v902, 2147483648
    %v907 = vmul.f32 %v905, 1.442695
    %v908 = vpow.pop %v907
    %v909 = vmul.f32 %v906, 1.442695
    %v910 = vpow.pop %v909
    %v911 = vadd.f32 %v908, 1.0
    %v912 = vadd.f32 %v910, 1.0
    %v913 = vrcp.pop %v911
    %v914 = vmul.f32 1.0, %v913
    %v915 = vrcp.pop %v912
    %v916 = vmul.f32 1.0, %v915
    %v919 = vrot.slane %v903, 6
    %v920 = vrot.slane %v904, 5
    %v921 = vsel %vm234, %v920, %v919
    %v925 = vrot.slane %v914, 6
    %v926 = vrot.slane %v916, 5
    %v927 = vsel %vm234, %v926, %v925
    %v929 = vsel %vm140, %v921, %v927
    %930 = vrot.lane.b32.xlu0 %v929, 96
    %v931 = vpop.permute.xlu0 %930
    %932 = vrot.lane.b32.xlu0 %v929, 64
    %v933 = vpop.permute.xlu0 %932
    %934 = vrot.lane.b32.xlu0 %v929, 32
    %v935 = vpop.permute.xlu0 %934
    %v936 = vmul.f32 %v931, %v823
    %v937 = vmul.f32 %v929, %v933
    %v938 = vadd.f32 %v936, %v937
    %v939 = vtanh.pop %v938
    %v940 = vmul.f32 %v935, %v939
    %941 = vmatprep.subr.mxu0 0.0
    %942 = vmatpush1.msra.mxu0 %v120
    %943 = vmatprep.subr.mxu0 0.0
    %944 = vmatpush1.msra.mxu0 %v121
    %945 = vmatprep.subr.mxu0 0.0
    %946 = vmatpush1.msra.mxu0 %v122
    %947 = vmatprep.subr.mxu0 0.0
    %948 = vmatpush1.msra.mxu0 %v123
    %949 = vmatprep.subr.mxu0 0.0
    %950 = vmatpush1.msra.mxu0 %v124
    %951 = vmatprep.subr.mxu0 0.0
    %952 = vmatpush1.msra.mxu0 %v125
    %953 = vmatprep.subr.mxu0 0.0
    %954 = vmatpush1.msra.mxu0 %v126
    %955 = vmatprep.subr.mxu0 0.0
    %956 = vmatpush1.msra.mxu0 %v127
    %957 = vmatprep.subr.mxu0 0.0
    %958 = vmatpush1.msra.mxu0 %v128
    %959 = vmatprep.subr.mxu0 0.0
    %960 = vmatpush1.msra.mxu0 %v129
    %961 = vmatprep.subr.mxu0 0.0
    %962 = vmatpush1.msra.mxu0 %v130
    %963 = vmatprep.subr.mxu0 0.0
    %964 = vmatpush1.msra.mxu0 %v131
    %965 = vmatprep.subr.mxu0 0.0
    %966 = vmatpush1.msra.mxu0 %v132
    %967 = vmatprep.subr.mxu0 0.0
    %968 = vmatpush1.msra.mxu0 %v133
    %969 = vmatprep.subr.mxu0 0.0
    %970 = vmatpush1.msra.mxu0 %v134
    %971 = vmatprep.subr.mxu0 0.0
    %972 = vmatpush1.msra.mxu0 %v135
    %973 = vmatprep.subr.mxu0 0.0
    %974 = vmatpush1.msra.mxu0 0.0
    %975 = vmatprep.subr.mxu0 0.0
    %976 = vmatpush1.msra.mxu0 0.0
    %977 = vmatprep.subr.mxu0 0.0
    %978 = vmatpush1.msra.mxu0 0.0
    %979 = vmatprep.subr.mxu0 0.0
    %980 = vmatpush1.msra.mxu0 0.0
    %981 = vmatprep.subr.mxu0 0.0
    %982 = vmatpush1.msra.mxu0 0.0
    %983 = vmatprep.subr.mxu0 0.0
    %984 = vmatpush1.msra.mxu0 0.0
    %985 = vmatprep.subr.mxu0 0.0
    %986 = vmatpush1.msra.mxu0 0.0
    %987 = vmatprep.subr.mxu0 0.0
    %988 = vmatpush1.msra.mxu0 0.0
    %989 = vmatprep.subr.mxu0 0.0
    %990 = vmatpush1.msra.mxu0 0.0
    %991 = vmatprep.subr.mxu0 0.0
    %992 = vmatpush1.msra.mxu0 0.0
    %993 = vmatprep.subr.mxu0 0.0
    %994 = vmatpush1.msra.mxu0 0.0
    %995 = vmatprep.subr.mxu0 0.0
    %996 = vmatpush1.msra.mxu0 0.0
    %997 = vmatprep.subr.mxu0 0.0
    %998 = vmatpush1.msra.mxu0 0.0
    %999 = vmatprep.subr.mxu0 0.0
    %1000 = vmatpush1.msra.mxu0 0.0
    %1001 = vmatprep.subr.mxu0 0.0
    %1002 = vmatpush1.msra.mxu0 0.0
    %1003 = vmatprep.subr.mxu0 0.0
    %1004 = vmatpush1.msra.mxu0 0.0
    %1005 = vmatprep.mubr.f32.mxu0 0.0
    %1006 = vmatmul.mubr.f32.gmra.mrb[0].mxu0 %v940
    %v1007 = vpop.f32.mrb[0].mxu0
    %v1008 = vadd.f32 0.0, %v1007
    %v1009 = vpop.f32.mrb[0].mxu0
    %1010 = vdwg.mxu0
    %v1012 = vrot.slane %v1008, 1
    %v1013 = vrot.slane %v1008, 2
    %v1016 = vadd.f32 %v112, %v1012
    %v1017 = vadd.f32 %v117, %v1013
    %v1018 = vtanh.pop %v1016
    %v1019 = vtanh.pop %v1017
    %v1020 = vxor.u32 %v1016, 2147483648
    %v1021 = vxor.u32 %v1017, 2147483648
    %v1022 = vmul.f32 %v1020, 1.442695
    %v1023 = vpow.pop %v1022
    %v1024 = vmul.f32 %v1021, 1.442695
    %v1025 = vpow.pop %v1024
    %v1026 = vadd.f32 %v1023, 1.0
    %v1027 = vadd.f32 %v1025, 1.0
    %v1028 = vrcp.pop %v1026
    %v1029 = vmul.f32 1.0, %v1028
    %v1030 = vrcp.pop %v1027
    %v1031 = vmul.f32 1.0, %v1030
    %v1034 = vrot.slane %v1018, 7
    %v1035 = vrot.slane %v1019, 6
    %v1036 = vsel %vm234, %v1035, %v1034
    %v1040 = vrot.slane %v1029, 7
    %v1041 = vrot.slane %v1031, 6
    %v1042 = vsel %vm234, %v1041, %v1040
    %v1044 = vsel %vm140, %v1036, %v1042
    %1045 = vrot.lane.b32.xlu0 %v1044, 96
    %v1046 = vpop.permute.xlu0 %1045
    %1047 = vrot.lane.b32.xlu0 %v1044, 64
    %v1048 = vpop.permute.xlu0 %1047
    %1049 = vrot.lane.b32.xlu0 %v1044, 32
    %v1050 = vpop.permute.xlu0 %1049
    %v1051 = vmul.f32 %v1046, %v938
    %v1052 = vmul.f32 %v1044, %v1048
    %v1053 = vadd.f32 %v1051, %v1052
    %v1054 = vtanh.pop %v1053
    %v1055 = vmul.f32 %v1050, %v1054
    %v1056 = vld [vmem:[%s4] sm:$0xff]
    %v1057 = vld [vmem:[%s4 + $0x8] sm:$0xff]
    %v1058 = vld [vmem:[%s4 + $0x10] sm:$0xff]
    %v1059 = vld [vmem:[%s4 + $0x18] sm:$0xff]
    %v1060 = vld [vmem:[%s4 + $0x20] sm:$0xff]
    %v1061 = vld [vmem:[%s4 + $0x28] sm:$0xff]
    %v1062 = vld [vmem:[%s4 + $0x30] sm:$0xff]
    %v1063 = vld [vmem:[%s4 + $0x38] sm:$0xff]
    %v1064 = vld [vmem:[%s4 + $0x40] sm:$0xff]
    %v1065 = vld [vmem:[%s4 + $0x48] sm:$0xff]
    %v1066 = vld [vmem:[%s4 + $0x50] sm:$0xff]
    %v1067 = vld [vmem:[%s4 + $0x58] sm:$0xff]
    %v1068 = vld [vmem:[%s4 + $0x60] sm:$0xff]
    %v1069 = vld [vmem:[%s4 + $0x68] sm:$0xff]
    %v1070 = vld [vmem:[%s4 + $0x70] sm:$0xff]
    %v1071 = vld [vmem:[%s4 + $0x78] sm:$0xff]
    %v1072 = vld [vmem:[%s5] sm:$0x1]
    %v1074 = vlaneseq
    %v1075 = vshrl.u32 %v1074, 7
    %v1076 = vsub.s32 0, %v1075
    %v1077 = vrot.slane %v1072, %v1076
    %1079 = vmatprep.subr.mxu0 0.0
    %1080 = vmatpush1.msra.mxu0 %v1056
    %1081 = vmatprep.subr.mxu0 0.0
    %1082 = vmatpush1.msra.mxu0 %v1057
    %1083 = vmatprep.subr.mxu0 0.0
    %1084 = vmatpush1.msra.mxu0 %v1058
    %1085 = vmatprep.subr.mxu0 0.0
    %1086 = vmatpush1.msra.mxu0 %v1059
    %1087 = vmatprep.subr.mxu0 0.0
    %1088 = vmatpush1.msra.mxu0 %v1060
    %1089 = vmatprep.subr.mxu0 0.0
    %1090 = vmatpush1.msra.mxu0 %v1061
    %1091 = vmatprep.subr.mxu0 0.0
    %1092 = vmatpush1.msra.mxu0 %v1062
    %1093 = vmatprep.subr.mxu0 0.0
    %1094 = vmatpush1.msra.mxu0 %v1063
    %1095 = vmatprep.subr.mxu0 0.0
    %1096 = vmatpush1.msra.mxu0 %v1064
    %1097 = vmatprep.subr.mxu0 0.0
    %1098 = vmatpush1.msra.mxu0 %v1065
    %1099 = vmatprep.subr.mxu0 0.0
    %1100 = vmatpush1.msra.mxu0 %v1066
    %1101 = vmatprep.subr.mxu0 0.0
    %1102 = vmatpush1.msra.mxu0 %v1067
    %1103 = vmatprep.subr.mxu0 0.0
    %1104 = vmatpush1.msra.mxu0 %v1068
    %1105 = vmatprep.subr.mxu0 0.0
    %1106 = vmatpush1.msra.mxu0 %v1069
    %1107 = vmatprep.subr.mxu0 0.0
    %1108 = vmatpush1.msra.mxu0 %v1070
    %1109 = vmatprep.subr.mxu0 0.0
    %1110 = vmatpush1.msra.mxu0 %v1071
    %1111 = vmatprep.subr.mxu0 0.0
    %1112 = vmatpush1.msra.mxu0 0.0
    %1113 = vmatprep.subr.mxu0 0.0
    %1114 = vmatpush1.msra.mxu0 0.0
    %1115 = vmatprep.subr.mxu0 0.0
    %1116 = vmatpush1.msra.mxu0 0.0
    %1117 = vmatprep.subr.mxu0 0.0
    %1118 = vmatpush1.msra.mxu0 0.0
    %1119 = vmatprep.subr.mxu0 0.0
    %1120 = vmatpush1.msra.mxu0 0.0
    %1121 = vmatprep.subr.mxu0 0.0
    %1122 = vmatpush1.msra.mxu0 0.0
    %1123 = vmatprep.subr.mxu0 0.0
    %1124 = vmatpush1.msra.mxu0 0.0
    %1125 = vmatprep.subr.mxu0 0.0
    %1126 = vmatpush1.msra.mxu0 0.0
    %1127 = vmatprep.subr.mxu0 0.0
    %1128 = vmatpush1.msra.mxu0 0.0
    %1129 = vmatprep.subr.mxu0 0.0
    %1130 = vmatpush1.msra.mxu0 0.0
    %1131 = vmatprep.subr.mxu0 0.0
    %1132 = vmatpush1.msra.mxu0 0.0
    %1133 = vmatprep.subr.mxu0 0.0
    %1134 = vmatpush1.msra.mxu0 0.0
    %1135 = vmatprep.subr.mxu0 0.0
    %1136 = vmatpush1.msra.mxu0 0.0
    %1137 = vmatprep.subr.mxu0 0.0
    %1138 = vmatpush1.msra.mxu0 0.0
    %1139 = vmatprep.subr.mxu0 0.0
    %1140 = vmatpush1.msra.mxu0 0.0
    %1141 = vmatprep.subr.mxu0 0.0
    %1142 = vmatpush1.msra.mxu0 0.0
    %1143 = vmatprep.mubr.f32.mxu0 0.0
    %1144 = vmatmul.mubr.f32.gmra.mrb[0].mxu0 %v1055
    %v1145 = vpop.f32.mrb[0].mxu0
    %v1146 = vadd.f32 %v1077, %v1145
    %v1147 = vpop.f32.mrb[0].mxu0
    %1148 = vdwg.mxu0
    %vm1149 = vcmask 25600
    %1150 = vst.msk [vmem:[#allocation2] sm:$0x3] %vm1149, %v1146
    // Predicated region
    $region26: #{tpu_custom_call.1} parent=1 // pred_check
      _
    $region27: #{tpu_custom_call.1} parent=1 // pred_check_branch
      %1152 = sbr.rel (0) target = $region29
    $region28: #{tpu_custom_call.1} parent=1 // pred_region
      %s1154 = ssub.s32 32, 32
      %1155 = vsyncadd [#allocation3], %s1154
      %s1157 = sshll.u32 [#allocation2], 4
      %s1158 = int_to_ptr.vmem [resolvable:$true] %s1157
      %1160 = dma.vmem_to_hbm [thread:$0]  %s1158, 32, %s6, [#allocation3]
    $region29: #{tpu_custom_call.1} parent=1 // pred_fallthru
      _
    // Predicated region
    $region30: #{tpu_custom_call.1} parent=1 // pred_check
      _
    $region31: #{tpu_custom_call.1} parent=1 // pred_check_branch
      %1162 = sbr.rel (0) target = $region33
    $region32: #{tpu_custom_call.1} parent=1 // pred_region
      %1163 = dma.done [#allocation3], 32
    $region33: #{tpu_custom_call.1} parent=1 // pred_fallthru
      _
    %1164 = vsyncpa [#allocation3], 1

</llo_original>
